<compile_context>
chip_gen: v6e
topology: v6e:2x2x1
jax: 0.10.0
libtpu: 0.0.40
codegen_flags: <defaults>
</compile_context>

<pallas_src>
import jax
import jax.numpy as jnp
from jax import lax
from jax.experimental import pallas as pl
from jax.experimental.pallas import tpu as pltpu


# ----------------------------------------------------------------------------
# int32 hash + inverse normal CDF helpers (all plain jnp / lax ops)
# ----------------------------------------------------------------------------
def _to_i32(v: int) -> int:
    v &= 0xFFFFFFFF
    return v - 0x100000000 if v >= 0x80000000 else v


_M1 = _to_i32(0x7FEB352D)
_M2 = _to_i32(0x846CA68B)
_GOLD = _to_i32(0x9E3779B9)
_ONE_BITS = _to_i32(0x3F800001)   # f32 1.0 exponent, mantissa low bit forced


def _srl(x, k: int):
    """Logical right shift on int32 (no mask ANDs)."""
    return lax.shift_right_logical(x, jnp.int32(k))


def _mix32(x):
    """lowbias32 integer finalizer; int32 multiply wraps mod 2^32."""
    x = x ^ _srl(x, 16)
    x = x * jnp.int32(_M1)
    x = x ^ _srl(x, 15)
    x = x * jnp.int32(_M2)
    x = x ^ _srl(x, 16)
    return x


# Acklam's rational approximation of the inverse standard-normal CDF.
_A = (-3.969683028665376e+01, 2.209460984245205e+02, -2.759285104469687e+02,
      1.383577518672690e+02, -3.066479806614716e+01, 2.506628277459239e+00)
_B = (-5.447609879822406e+01, 1.615858368580409e+02, -1.556989798598866e+02,
      6.680131188771972e+01, -1.328068155288572e+01)
_C = (-7.784894002430293e-03, -3.223964580411365e-01, -2.400758277161838e+00,
      -2.549732539343734e+00, 4.374664141464968e+00, 2.938163982698783e+00)
_D = (7.784695709041462e-03, 3.224671290700398e-01, 2.445134137142996e+00,
      3.754408661907416e+00)
_P_LOW = 0.02425


def _norminv(u):
    """Inverse standard-normal CDF; u must be strictly inside (0, 1).

    Tail symmetry: one log + one sqrt + one tail rational per element, sign
    flipped by the side of 0.5.  Divides are EUP approx reciprocals.
    """
    q = u - 0.5
    t = 0.5 - jnp.abs(q)                      # = min(u, 1-u), strictly > 0 here

    # Central region |q| <= 0.5 - P_LOW
    r = q * q
    num = ((((_A[0] * r + _A[1]) * r + _A[2]) * r + _A[3]) * r + _A[4]) * r + _A[5]
    den = ((((_B[0] * r + _B[1]) * r + _B[2]) * r + _B[3]) * r + _B[4]) * r + 1.0
    x_central = num * q * pl.reciprocal(den, approx=True)

    # Tail region t < P_LOW (single transcendental chain thanks to symmetry)
    s = jnp.sqrt(-2.0 * jnp.log(t))
    cnum = ((((_C[0] * s + _C[1]) * s + _C[2]) * s + _C[3]) * s + _C[4]) * s + _C[5]
    cden = (((_D[0] * s + _D[1]) * s + _D[2]) * s + _D[3]) * s + 1.0
    x_t = cnum * pl.reciprocal(cden, approx=True)   # negative (low-tail value)
    x_tail = jnp.where(q > 0.0, -x_t, x_t)

    return jnp.where(t < _P_LOW, x_tail, x_central)


# ----------------------------------------------------------------------------
# Kernel 1: make_image_text_emb hot path (weighted sum + repeat + fused concat)
# ----------------------------------------------------------------------------
def _image_emb_kernel(w_ref, enc_ref, zero_ref, out_ref):
    # w_ref   : (N,)   normalized mixing weights in SMEM (scalars)
    # enc_ref : (N, D) stacked per-prompt / per-image CLIP embeddings (VMEM)
    # zero_ref: (B, D) zero / negative-decoder embedding (VMEM)
    # out_ref : (2B, D) = [weighted sum repeated B times ; zero_image_emb]
    n, d = enc_ref.shape
    b = zero_ref.shape[0]
    # Scalar-from-SMEM * full-vreg FMA chain (no 1-lane operand, no XLU reduce)
    acc = w_ref[0] * enc_ref[0:1, :]
    for i in range(1, n):
        acc = acc + w_ref[i] * enc_ref[i:i + 1, :]
    out_ref[0:b, :] = jnp.broadcast_to(acc, (b, d))
    out_ref[b:2 * b, :] = zero_ref[...]


def make_image_text_emb_pallas(encoded, weights, zero_image_emb, batch_size):
    """encoded: (N, D); weights: (N,); zero_image_emb: (batch_size, D)."""
    N, D = encoded.shape
    assert zero_image_emb.shape == (batch_size, D)
    w = jnp.asarray(weights, dtype=jnp.float32)
    w = w / jnp.sum(w)            # weights /= weights.sum(), hoisted (N is tiny)
    return pl.pallas_call(
        _image_emb_kernel,
        out_shape=jax.ShapeDtypeStruct((2 * batch_size, D), jnp.float32),
        in_specs=[
            pl.BlockSpec(memory_space=pltpu.MemorySpace.SMEM),   # weights
            pl.BlockSpec(memory_space=pltpu.MemorySpace.VMEM),   # encoded
            pl.BlockSpec(memory_space=pltpu.MemorySpace.VMEM),   # zero emb
        ],
        out_specs=pl.BlockSpec(memory_space=pltpu.MemorySpace.VMEM),
    )(w, encoded.astype(jnp.float32), zero_image_emb.astype(jnp.float32))


# ----------------------------------------------------------------------------
# Kernel 2: sample_noise (standard-normal latent noise, seeded, grid-invariant)
# ----------------------------------------------------------------------------
_LANE = 512             # lane-dense last dim (multiple of 128)
_MAX_BLOCK_ROWS = 2048  # 2048 x 512 x 4 B = 4 MiB per output block


def _noise_kernel(seed_ref, out_ref):
    # seed_ref: (1,) int32 in SMEM ; out_ref: (block_rows, _LANE) f32
    rows, lane = out_ref.shape
    base = pl.program_id(0) * (rows * lane)
    row = lax.broadcasted_iota(jnp.int32, (rows, lane), 0)
    col = lax.broadcasted_iota(jnp.int32, (rows, lane), 1)
    idx = base + row * jnp.int32(lane) + col            # absolute flat index
    x = idx ^ (seed_ref[0] * jnp.int32(_GOLD))           # seed-dependent stream
    x = _mix32(x)                                        # single lowbias32 pass
    # top 23 bits -> mantissa of 1.0f (low bit forced so u is never 0 or 1)
    bits = _srl(x, 9) | jnp.int32(_ONE_BITS)
    u = pltpu.bitcast(bits, jnp.float32) - 1.0           # u in (0, 1)
    out_ref[...] = _norminv(u)


def _get_new_h_w(h, w):
    # mirrors kandinsky's get_new_h_w: ceil(dim/64) * 8 latent resolution
    new_h = h // 64 + (1 if h % 64 != 0 else 0)
    new_w = w // 64 + (1 if w % 64 != 0 else 0)
    return new_h * 8, new_w * 8


def _tensorcores_per_device() -> int:
    """Best-effort TC-per-device count; only used for grid sizing."""
    try:
        kind = jax.devices()[0].device_kind.lower()
    except Exception:
        return 1
    single_tc = ("v5e", "v5 lite", "v5lite", "v6e", "v6 lite", "v6lite",
                 "v2", "v3")
    if any(tag in kind for tag in single_tc):
        return 1
    return 2   # v4 / v5p / v7x style devices (2 TCs or megacore)


def sample_noise_pallas(width, height, seed, batch_size):
    new_h, new_w = _get_new_h_w(height, width)
    total = batch_size * 2 * 4 * new_h * new_w
    # 2*4*new_h*new_w is always a multiple of 8*64 = 512
    assert total % _LANE == 0
    rows = total // _LANE

    # Grid sizing: one big block on single-TC chips; >=2 blocks on 2-TC chips
    # so the "parallel" axis actually splits the compute-bound generation.
    tcs = _tensorcores_per_device()
    if tcs >= 2 and rows >= 16:
        block_rows = ((pl.cdiv(rows, tcs) + 7) // 8) * 8
    else:
        block_rows = rows
    block_rows = min(block_rows, _MAX_BLOCK_ROWS)
    block_rows = max(1, block_rows)
    grid = pl.cdiv(rows, block_rows)

    flat = pl.pallas_call(
        _noise_kernel,
        out_shape=jax.ShapeDtypeStruct((rows, _LANE), jnp.float32),
        grid=(grid,),
        in_specs=[pl.BlockSpec(memory_space=pltpu.MemorySpace.SMEM)],
        out_specs=pl.BlockSpec((block_rows, _LANE), lambda i: (i, 0)),
        compiler_params=pltpu.CompilerParams(
            dimension_semantics=("parallel",)),
        cost_estimate=pl.CostEstimate(
            flops=40 * total,          # hash + two rationals per element
            transcendentals=2 * total,  # one log + one sqrt per element
            bytes_accessed=4 * total),
    )(jnp.array([seed], dtype=jnp.int32))
    # back to PyTorch's NCHW convention (values are tiling-independent)
    return flat.reshape(batch_size * 2, 4, new_h, new_w)


# ----------------------------------------------------------------------------
# Thin wrapper mirroring ImagineKandinsky's embedding / noise plumbing
# ----------------------------------------------------------------------------
class ImagineKandinskyPallas:
    # TODO(synk): CLIP prior / text encoder / diffusion UNet / MOVQ decoder
    # (self.model.*) are pretrained sub-models with no clean Pallas equivalent.
    def __init__(self, width, height):
        self.w = width
        self.h = height

    def make_image_text_emb(self, encoded, weights, zero_image_emb, batch_size):
        return make_image_text_emb_pallas(encoded, weights, zero_image_emb, batch_size)

    def sample_noise(self, width=None, height=None, seed=1, batch_size=1):
        width = self.w if width is None else width
        height = self.h if height is None else height
        return sample_noise_pallas(width, height, seed, batch_size)


if __name__ == "__main__":
    key = jax.random.PRNGKey(0)
    batch_size = 2
    D = 256          # small stand-in for the 768-d CLIP image embedding
    N = 3            # e.g. [prompt, style prompt, style image]

    k1, k2 = jax.random.split(key, 2)
    # Deterministic stand-ins for model.generate_clip_emb / model.encode_images
    encoded = jax.random.normal(k1, (N, D), dtype=jnp.float32)
    weights = jnp.array([1.0, 0.5, 0.5], dtype=jnp.float32)
    # Stand-in for model.create_zero_img_emb(batch_size)
    zero_image_emb = jax.random.normal(k2, (batch_size, D), dtype=jnp.float32)

    module = ImagineKandinskyPallas(width=64, height=64)

    image_emb = jax.block_until_ready(
        module.make_image_text_emb(encoded, weights, zero_image_emb, batch_size))

    # Pure-JAX reference for the embedding combine (+ repeat + concat)
    w_norm = weights / weights.sum()
    combined = (encoded * w_norm[:, None]).sum(axis=0)
    ref = jnp.concatenate(
        [jnp.tile(combined[None, :], (batch_size, 1)), zero_image_emb], axis=0)
    assert image_emb.shape == (2 * batch_size, D)
    assert jnp.allclose(image_emb, ref, atol=1e-5), "image_emb mismatch vs reference"

    noise = jax.block_until_ready(module.sample_noise(seed=1, batch_size=batch_size))
    assert noise.shape == (batch_size * 2, 4, 8, 8)
    assert bool(jnp.all(jnp.isfinite(noise)))
    m = float(jnp.mean(noise))
    s = float(jnp.std(noise))
    assert abs(m) < 0.25 and 0.7 < s < 1.3, (m, s)   # loose N(0,1) sanity check

    print("KERNEL_OK")
</pallas_src>

<mosaic_0001>
module attributes {stable_mosaic.version = 11 : i64} {
  func.func @_image_emb_kernel(%arg0: memref<3xf32, #tpu.memory_space<smem>>, %arg1: memref<3x256xf32, #tpu.memory_space<vmem>>, %arg2: memref<2x256xf32, #tpu.memory_space<vmem>>, %arg3: memref<4x256xf32, #tpu.memory_space<vmem>>) attributes {dimension_semantics = [], scalar_prefetch = 0 : i64, scratch_operands = 0 : i64, tpu.core_type = #tpu.core_type<tc>} {
    %c0 = arith.constant 0 : index
    %0 = memref.load %arg0[%c0] : memref<3xf32, #tpu.memory_space<smem>>
    %c0_0 = arith.constant 0 : index
    %c0_1 = arith.constant 0 : index
    %1 = vector.load %arg1[%c0_0, %c0_1] : memref<3x256xf32, #tpu.memory_space<vmem>>, vector<1x256xf32>
    %2 = vector.broadcast %0 : f32 to vector<1x256xf32>
    %3 = arith.mulf %2, %1 : vector<1x256xf32>
    %c1 = arith.constant 1 : index
    %4 = memref.load %arg0[%c1] : memref<3xf32, #tpu.memory_space<smem>>
    %c1_2 = arith.constant 1 : index
    %c0_3 = arith.constant 0 : index
    %5 = vector.load %arg1[%c1_2, %c0_3] : memref<3x256xf32, #tpu.memory_space<vmem>>, vector<1x256xf32>
    %6 = vector.broadcast %4 : f32 to vector<1x256xf32>
    %7 = arith.mulf %6, %5 : vector<1x256xf32>
    %8 = arith.addf %3, %7 : vector<1x256xf32>
    %c2 = arith.constant 2 : index
    %9 = memref.load %arg0[%c2] : memref<3xf32, #tpu.memory_space<smem>>
    %c2_4 = arith.constant 2 : index
    %c0_5 = arith.constant 0 : index
    %10 = vector.load %arg1[%c2_4, %c0_5] : memref<3x256xf32, #tpu.memory_space<vmem>>, vector<1x256xf32>
    %11 = vector.broadcast %9 : f32 to vector<1x256xf32>
    %12 = arith.mulf %11, %10 : vector<1x256xf32>
    %13 = arith.addf %8, %12 : vector<1x256xf32>
    %14 = vector.shape_cast %13 : vector<1x256xf32> to vector<1x256xf32>
    %15 = vector.broadcast %14 : vector<1x256xf32> to vector<2x256xf32>
    %c0_6 = arith.constant 0 : index
    %c0_7 = arith.constant 0 : index
    %16 = vector.load %arg3[%c0_6, %c0_7] : memref<4x256xf32, #tpu.memory_space<vmem>>, vector<2x256xf32>
    tpu.vector_store %arg3[%c0_6, %c0_7], %15 {strides = array<i32>} : memref<4x256xf32, #tpu.memory_space<vmem>>, vector<2x256xf32>,
    %c0_8 = arith.constant 0 : index
    %c0_9 = arith.constant 0 : index
    %17 = vector.load %arg2[%c0_8, %c0_9] : memref<2x256xf32, #tpu.memory_space<vmem>>, vector<2x256xf32>
    %c2_10 = arith.constant 2 : index
    %c0_11 = arith.constant 0 : index
    %18 = vector.load %arg3[%c2_10, %c0_11] : memref<4x256xf32, #tpu.memory_space<vmem>>, vector<2x256xf32>
    tpu.vector_store %arg3[%c2_10, %c0_11], %17 {strides = array<i32>} : memref<4x256xf32, #tpu.memory_space<vmem>>, vector<2x256xf32>,
    return
  }
}

</mosaic_0001>

<llo_original>
// kernel: tpu_custom_call.1
$region0: #{tpu_custom_call.1}
  #allocation0 [shape = 'u32[]', space=smem, size = 0x4, offset = 0x4, fixed_abs, tag = 'smem constant byte address 0x4 - core index']
  #allocation1 [shape = 'u32[144,128]{1,0:T(1,128)}', space=vmem, size = 0x12000, scoped, tag = 'internal scratch']
  %s0 = inlined_call_operand.hbm [shape: f32[3], index: 0, kind: input, shape index: {}]
  %s1 = inlined_call_operand.hbm [shape: f32[3,256], index: 1, kind: input, shape index: {}]
  %s2 = inlined_call_operand.hbm [shape: f32[2,256], index: 2, kind: input, shape index: {}]
  %s3 = inlined_call_operand.hbm [shape: f32[4,256], index: 3, kind: output, shape index: {}]
  %s4 = sld [smem:[#allocation0]]
  $region34: #{tpu_custom_call.1} parent=0
    _
  %s6 = ssub.s32 1, %s4
  %s7 = scalar_select 0, %s6, %s4
  $region1: #{tpu_custom_call.1} parent=0
    #allocation2 [shape = 'u8[512]{0}', space=smem, size = 0x200, scoped, tag = 'input window, operand 0, single buffered']
    #allocation3 [shape = 's32[1]{0}', space=sflag, size = 0x4, scoped, tag = 'scoped memory for tpu_custom_call.1']
    #allocation4 [shape = 's32[1]{0}', space=sflag, size = 0x4, scoped, tag = 'scoped memory for tpu_custom_call.1']
    #allocation5 [shape = 's32[1]{0}', space=sflag, size = 0x4, scoped, tag = 'scoped memory for tpu_custom_call.1']
    #allocation6 [shape = 'u8[4096]{0}', space=vmem, size = 0x1000, scoped, tag = 'input window, operand 1, single buffered']
    #allocation7 [shape = 'u8[2048]{0}', space=vmem, size = 0x800, scoped, tag = 'input window, operand 2, single buffered']
    #allocation8 [shape = 's32[1]{0}', space=sflag, size = 0x4, scoped, tag = 'scoped memory for tpu_custom_call.1']
    #allocation9 [shape = 'u8[4096]{0}', space=vmem, size = 0x1000, scoped, tag = 'output window, operand 0, single buffered']
    %8 = vsyncpa [#allocation5], 0
    %9 = vsyncpa [#allocation3], 0
    %10 = vsyncpa [#allocation8], 0
    %11 = vsyncpa [#allocation4], 0
    // Predicated region
    $region2: #{tpu_custom_call.1} parent=1 // pred_check
      _
    $region3: #{tpu_custom_call.1} parent=1 // pred_check_branch
      %13 = sbr.rel (0) target = $region5
    $region4: #{tpu_custom_call.1} parent=1 // pred_region
      %s15 = ssub.s32 16, 16
      %16 = vsyncadd [#allocation5], %s15
      %19 = dma.hbm_to_smem %s0, 16, [#allocation2], [#allocation5]
    $region5: #{tpu_custom_call.1} parent=1 // pred_fallthru
      _
    // Predicated region
    $region6: #{tpu_custom_call.1} parent=1 // pred_check
      _
    $region7: #{tpu_custom_call.1} parent=1 // pred_check_branch
      %21 = sbr.rel (0) target = $region9
    $region8: #{tpu_custom_call.1} parent=1 // pred_region
      %s23 = ssub.s32 128, 128
      %24 = vsyncadd [#allocation3], %s23
      %s26 = sshll.u32 [#allocation6], 4
      %s27 = int_to_ptr.vmem [resolvable:$true] %s26
      %29 = dma.hbm_to_vmem [thread:$0]  %s1, 128, %s27, [#allocation3]
    $region9: #{tpu_custom_call.1} parent=1 // pred_fallthru
      _
    // Predicated region
    $region10: #{tpu_custom_call.1} parent=1 // pred_check
      _
    $region11: #{tpu_custom_call.1} parent=1 // pred_check_branch
      %31 = sbr.rel (0) target = $region13
    $region12: #{tpu_custom_call.1} parent=1 // pred_region
      %s33 = ssub.s32 64, 64
      %34 = vsyncadd [#allocation8], %s33
      %s36 = sshll.u32 [#allocation7], 4
      %s37 = int_to_ptr.vmem [resolvable:$true] %s36
      %39 = dma.hbm_to_vmem [thread:$0]  %s2, 64, %s37, [#allocation8]
    $region13: #{tpu_custom_call.1} parent=1 // pred_fallthru
      _
    // Predicated region
    $region14: #{tpu_custom_call.1} parent=1 // pred_check
      _
    $region15: #{tpu_custom_call.1} parent=1 // pred_check_branch
      %41 = sbr.rel (0) target = $region17
    $region16: #{tpu_custom_call.1} parent=1 // pred_region
      %42 = dma.done [#allocation5], 16
    $region17: #{tpu_custom_call.1} parent=1 // pred_fallthru
      _
    // Predicated region
    $region18: #{tpu_custom_call.1} parent=1 // pred_check
      _
    $region19: #{tpu_custom_call.1} parent=1 // pred_check_branch
      %44 = sbr.rel (0) target = $region21
    $region20: #{tpu_custom_call.1} parent=1 // pred_region
      %45 = dma.done [#allocation3], 128
    $region21: #{tpu_custom_call.1} parent=1 // pred_fallthru
      _
    // Predicated region
    $region22: #{tpu_custom_call.1} parent=1 // pred_check
      _
    $region23: #{tpu_custom_call.1} parent=1 // pred_check_branch
      %47 = sbr.rel (0) target = $region25
    $region24: #{tpu_custom_call.1} parent=1 // pred_region
      %48 = dma.done [#allocation8], 64
    $region25: #{tpu_custom_call.1} parent=1 // pred_fallthru
      _
    %49 = sfence
    %s50 = sld [smem:[#allocation2]]
    %v51 = vld [vmem:[#allocation6] ss:$4 sm:$0x3]
    %v52 = vstv %s50
    %v53 = vmul.f32 %v52, %v51
    %s54 = sld [smem:[#allocation2 + $0x1]]
    %s55 = scalar_lea.vmem [#allocation6], 1
    %v56 = vld [vmem:[%s55] ss:$4 sm:$0x3]
    %v57 = vstv %s54
    %v58 = vmul.f32 %v57, %v56
    %v59 = vadd.f32 %v53, %v58
    %s60 = sld [smem:[#allocation2 + $0x2]]
    %s61 = scalar_lea.vmem [#allocation6], 2
    %v62 = vld [vmem:[%s61] ss:$4 sm:$0x3]
    %v63 = vstv %s60
    %v64 = vmul.f32 %v63, %v62
    %v65 = vadd.f32 %v59, %v64
    %v67 = vlaneseq
    %v68 = vshrl.u32 %v67, 7
    %v69 = vsub.s32 0, %v68
    %v70 = vrot.slane %v65, %v69
    %v71 = vlaneseq
    %v72 = vshrl.u32 %v71, 7
    %v73 = vsub.s32 1, %v72
    %v74 = vrot.slane %v65, %v73
    %v75 = vcombine.low %v70, %v74
    %77 = vst [vmem:[#allocation9] sm:$0x33] %v75
    %v78 = vld [vmem:[#allocation7] sm:$0xf]
    %v80 = vcombine.low %v78, %v78
    %v82 = vunpack.c.l.s4 1983009808
    %v83 = vunpack.c.0.s8 %v82
    %v84 = vlaneseq
    %v85 = vshrl.u32 %v84, 7
    %v86 = vsub.s32 %v83, %v85
    %v87 = vrot.slane %v80, %v86
    %89 = vst [vmem:[#allocation9] sm:$0xcc] %v87
    // Predicated region
    $region26: #{tpu_custom_call.1} parent=1 // pred_check
      _
    $region27: #{tpu_custom_call.1} parent=1 // pred_check_branch
      %91 = sbr.rel (0) target = $region29
    $region28: #{tpu_custom_call.1} parent=1 // pred_region
      %s93 = ssub.s32 128, 128
      %94 = vsyncadd [#allocation4], %s93
      %s96 = sshll.u32 [#allocation9], 4
      %s97 = int_to_ptr.vmem [resolvable:$true] %s96
      %99 = dma.vmem_to_hbm [thread:$0]  %s97, 128, %s3, [#allocation4]
    $region29: #{tpu_custom_call.1} parent=1 // pred_fallthru
      _
    // Predicated region
    $region30: #{tpu_custom_call.1} parent=1 // pred_check
      _
    $region31: #{tpu_custom_call.1} parent=1 // pred_check_branch
      %101 = sbr.rel (0) target = $region33
    $region32: #{tpu_custom_call.1} parent=1 // pred_region
      %102 = dma.done [#allocation4], 128
    $region33: #{tpu_custom_call.1} parent=1 // pred_fallthru
      _
    %103 = vsyncpa [#allocation3], 1
    %104 = vsyncpa [#allocation8], 1
    %105 = vsyncpa [#allocation4], 1
    %106 = vsyncpa [#allocation5], 1

</llo_original>
